<compile_context>
chip_gen: v6e
topology: v6e:2x2x1
jax: 0.10.0
libtpu: 0.0.40
codegen_flags: <defaults>
</compile_context>

<pallas_src>
import functools

import jax
import jax.numpy as jnp
from jax.experimental import pallas as pl
from jax.experimental.pallas import tpu as pltpu


def _round_up(a, m):
    return ((a + m - 1) // m) * m


def _detect_num_tensorcores():
    """Best-effort detection of TensorCores per device (megacore chips -> 2)."""
    try:
        d = jax.devices()[0]
        nc = getattr(d, "num_cores", None)
        if nc:
            return int(nc)
        kind = (getattr(d, "device_kind", "") or "").lower()
        if any(tag in kind for tag in ("v4", "v5p", "7")):
            return 2
    except Exception:
        pass
    return 1


def _rotinv_kernel(wt_ref, b_ref, x_ref, o_ref):
    # wt_ref : (6, N)  transposed rotation-invariant weight, resident every step
    # b_ref  : (1, N)  bias row, resident every step
    # x_ref  : (TB, 6) batch tile in natural layout (batch on sublanes)
    # o_ref  : (TB, N) output tile in natural layout
    acc = jnp.dot(x_ref[...], wt_ref[...], preferred_element_type=jnp.float32)
    o_ref[...] = (acc + b_ref[...]).astype(o_ref.dtype)


@functools.partial(jax.jit, static_argnames=("tile_b", "num_cores"))
def _rotation_invariant_impl(x, w1, w2, w3, bias, *, tile_b, num_cores):
    *lead, f_in = x.shape
    assert f_in == 6, "RotationInvariantLayer expects last dim == 6"
    batch = 1
    for d in lead:
        batch *= d

    # Build the rotation-invariant weight (tiny XLA ops, fused under jit).
    weight = jnp.concatenate([w1, w2, w3, -w2 - w3], axis=1)   # (N, 6)
    n_out = weight.shape[0]
    weight_t = weight.T                                        # (6, N)
    b_row = bias.reshape(1, n_out)                             # (1, N)

    if batch == 0:                                             # degenerate batch
        return jnp.zeros((*lead, n_out), dtype=x.dtype)

    x2 = x.reshape(batch, f_in)                                # natural layout, no pad

    # --- Tile selection --------------------------------------------------------
    # Large tiles amortize the ~0.35 us per-step overhead; never exceed the batch.
    tb = max(8, min(tile_b, _round_up(batch, 8)))
    if num_cores >= 2:
        # Megacore: aim for >= 2 steps per TensorCore and an even step count.
        min_steps = 2 * num_cores
        tb = min(tb, max(8, _round_up(pl.cdiv(batch, min_steps), 8)))
        steps = pl.cdiv(batch, tb)
        if steps > 1 and steps % num_cores != 0:
            steps = _round_up(steps, num_cores)
            tb = max(8, _round_up(pl.cdiv(batch, steps), 8))

    grid = (pl.cdiv(batch, tb),)   # ragged last block handled by Pallas masking

    out2 = pl.pallas_call(
        _rotinv_kernel,
        out_shape=jax.ShapeDtypeStruct((batch, n_out), x.dtype),
        grid_spec=pltpu.PrefetchScalarGridSpec(
            num_scalar_prefetch=0,
            grid=grid,
            in_specs=[
                # weight.T (6, N): full array, resident across the whole grid.
                pl.BlockSpec((f_in, n_out), lambda i: (0, 0)),
                # bias (1, N): full array, resident across the whole grid.
                pl.BlockSpec((1, n_out), lambda i: (0, 0)),
                # x tile (TB, 6): whole rows -> fully contiguous HBM read.
                pl.BlockSpec((tb, f_in), lambda i: (i, 0)),
            ],
            # out tile (TB, N): whole rows -> fully contiguous HBM write.
            out_specs=pl.BlockSpec((tb, n_out), lambda i: (i, 0)),
        ),
        compiler_params=pltpu.CompilerParams(
            dimension_semantics=("parallel",),
        ),
    )(weight_t, b_row, x2)

    return out2.reshape(*lead, n_out)


def rotation_invariant_forward(x, w1, w2, w3, bias, *, tile_b=4096, num_cores=None):
    """x: (..., 6) float32. Returns (..., N). Matches F.linear(x, weight, bias)."""
    if num_cores is None:
        num_cores = _detect_num_tensorcores()
    return _rotation_invariant_impl(
        x, w1, w2, w3, bias, tile_b=int(tile_b), num_cores=int(num_cores))


def _reference(x, w1, w2, w3, bias):
    weight = jnp.concatenate([w1, w2, w3, -w2 - w3], axis=1)
    return x @ weight.T + bias


if __name__ == "__main__":
    neurons = 32            # NeuronsPerLayer
    lead_shape = (3, 100)   # 300 rows -> exercises the ragged (non multiple-of-8) tail

    key = jax.random.PRNGKey(0)
    k1, k2, k3, k4, kx = jax.random.split(key, 5)
    w1 = jax.random.normal(k1, (neurons, 3), dtype=jnp.float32)
    w2 = jax.random.normal(k2, (neurons, 1), dtype=jnp.float32)
    w3 = jax.random.normal(k3, (neurons, 1), dtype=jnp.float32)
    bias = jax.random.normal(k4, (neurons,), dtype=jnp.float32)
    x = jax.random.normal(kx, lead_shape + (6,), dtype=jnp.float32)

    ref = _reference(x, w1, w2, w3, bias)

    # Default config: single large tile covering the whole (ragged) batch.
    out = jax.block_until_ready(rotation_invariant_forward(x, w1, w2, w3, bias))
    assert out.shape == lead_shape + (neurons,)
    assert jnp.allclose(out, ref, atol=1e-5, rtol=1e-5), "mismatch vs reference (default tile)"

    # Small tile: multi-step grid with a ragged last block (masked writeback path).
    out2 = jax.block_until_ready(
        rotation_invariant_forward(x, w1, w2, w3, bias, tile_b=128))
    assert jnp.allclose(out2, ref, atol=1e-5, rtol=1e-5), "mismatch vs reference (tiled grid)"

    print("KERNEL_OK")
</pallas_src>

<mosaic_0001>
module attributes {stable_mosaic.version = 11 : i64} {
  func.func @_rotinv_kernel(%arg0: i32, %arg1: memref<6x32xf32, #tpu.memory_space<vmem>>, %arg2: memref<1x32xf32, #tpu.memory_space<vmem>>, %arg3: memref<304x6xf32, #tpu.memory_space<vmem>>, %arg4: memref<304x32xf32, #tpu.memory_space<vmem>>) attributes {dimension_semantics = [#tpu.dimension_semantics<parallel>], iteration_bounds = array<i64: 1>, scalar_prefetch = 0 : i64, scratch_operands = 0 : i64, tpu.core_type = #tpu.core_type<tc>, window_params = [{pipeline_mode = #tpu.pipeline_mode<synchronous>, transform_indices = @transform_0, window_bounds = array<i64: 6, 32>}, {pipeline_mode = #tpu.pipeline_mode<synchronous>, transform_indices = @transform_1, window_bounds = array<i64: 1, 32>}, {transform_indices = @transform_2, window_bounds = array<i64: 304, 6>}, {transform_indices = @transform_3, window_bounds = array<i64: 304, 32>}]} {
    %c0 = arith.constant 0 : index
    %c0_0 = arith.constant 0 : index
    %0 = vector.load %arg3[%c0, %c0_0] : memref<304x6xf32, #tpu.memory_space<vmem>>, vector<304x6xf32>
    %c0_1 = arith.constant 0 : index
    %c0_2 = arith.constant 0 : index
    %1 = vector.load %arg1[%c0_1, %c0_2] : memref<6x32xf32, #tpu.memory_space<vmem>>, vector<6x32xf32>
    %cst = arith.constant dense<0.000000e+00> : vector<304x32xf32>
    %2 = tpu.matmul %0, %1, %cst {dimension_numbers = #tpu.dot_dimension_numbers<[1], [0], [0], [1], [0, 0, 1, 1], [], []>} : vector<304x6xf32>, vector<6x32xf32>, vector<304x32xf32> -> vector<304x32xf32>
    %c0_3 = arith.constant 0 : index
    %c0_4 = arith.constant 0 : index
    %3 = vector.load %arg2[%c0_3, %c0_4] : memref<1x32xf32, #tpu.memory_space<vmem>>, vector<1x32xf32>
    %4 = vector.broadcast %3 : vector<1x32xf32> to vector<304x32xf32>
    %5 = arith.addf %2, %4 : vector<304x32xf32>
    %c0_5 = arith.constant 0 : index
    %c0_6 = arith.constant 0 : index
    %6 = vector.load %arg4[%c0_5, %c0_6] : memref<304x32xf32, #tpu.memory_space<vmem>>, vector<304x32xf32>
    tpu.vector_store %arg4[%c0_5, %c0_6], %5 {strides = array<i32>} : memref<304x32xf32, #tpu.memory_space<vmem>>, vector<304x32xf32>,
    return
  }
  func.func @transform_0(%arg0: i32) -> (i32, i32) {
    %c0_i32 = arith.constant 0 : i32
    %c0_i32_0 = arith.constant 0 : i32
    %c0_i32_1 = arith.constant 0 : i32
    return %c0_i32, %c0_i32_0 : i32, i32
  }
  func.func @transform_1(%arg0: i32) -> (i32, i32) {
    %c0_i32 = arith.constant 0 : i32
    %c0_i32_0 = arith.constant 0 : i32
    %c0_i32_1 = arith.constant 0 : i32
    return %c0_i32, %c0_i32_0 : i32, i32
  }
  func.func @transform_2(%arg0: i32) -> (i32, i32) {
    %c0_i32 = arith.constant 0 : i32
    %c0_i32_0 = arith.constant 0 : i32
    return %arg0, %c0_i32 : i32, i32
  }
  func.func @transform_3(%arg0: i32) -> (i32, i32) {
    %c0_i32 = arith.constant 0 : i32
    %c0_i32_0 = arith.constant 0 : i32
    return %arg0, %c0_i32 : i32, i32
  }
}

</mosaic_0001>

<llo_original>
// kernel: _rotation_invariant_impl.1
$region0: #{_rotation_invariant_impl.1}
  #allocation0 [shape = 'u32[]', space=smem, size = 0x4, offset = 0x4, fixed_abs, tag = 'smem constant byte address 0x4 - core index']
  #allocation1 [shape = 'u32[144,128]{1,0:T(1,128)}', space=vmem, size = 0x12000, scoped, tag = 'internal scratch']
  %s0 = inlined_call_operand.vmem [shape: f32[6,32], index: 0, kind: input, shape index: {}]
  %s1 = inlined_call_operand.vmem [shape: f32[1,32], index: 1, kind: input, shape index: {}]
  %s2 = inlined_call_operand.vmem [shape: f32[300,6], index: 2, kind: input, shape index: {}]
  %s3 = inlined_call_operand.vmem [shape: f32[300,32], index: 3, kind: output, shape index: {}]
  %s4 = sld [smem:[#allocation0]]
  $region22: #{_rotation_invariant_impl.1} parent=0
    _
  %s6 = ssub.s32 1, %s4
  %s7 = scalar_select 0, %s6, %s4
  // Predicated region
  $region2: #{_rotation_invariant_impl.1} parent=0 // pred_check
    _
  $region3: #{_rotation_invariant_impl.1} parent=0 // pred_check_branch
    %9 = sbr.rel (0) target = $region5
  $region4: #{_rotation_invariant_impl.1} parent=0 // pred_region
    _
  $region5: #{_rotation_invariant_impl.1} parent=0 // pred_fallthru
    _
  // Predicated region
  $region6: #{_rotation_invariant_impl.1} parent=0 // pred_check
    _
  $region7: #{_rotation_invariant_impl.1} parent=0 // pred_check_branch
    %11 = sbr.rel (0) target = $region9
  $region8: #{_rotation_invariant_impl.1} parent=0 // pred_region
    _
  $region9: #{_rotation_invariant_impl.1} parent=0 // pred_fallthru
    _
  // Predicated region
  $region10: #{_rotation_invariant_impl.1} parent=0 // pred_check
    _
  $region11: #{_rotation_invariant_impl.1} parent=0 // pred_check_branch
    %13 = sbr.rel (0) target = $region13
  $region12: #{_rotation_invariant_impl.1} parent=0 // pred_region
    _
  $region13: #{_rotation_invariant_impl.1} parent=0 // pred_fallthru
    _
  %v14 = vld [vmem:[%s2] sm:$0xff]
  %v15 = vld [vmem:[%s2 + $0x8] sm:$0xff]
  %v16 = vld [vmem:[%s2 + $0x10] sm:$0xff]
  %v17 = vld [vmem:[%s2 + $0x18] sm:$0xff]
  %v18 = vld [vmem:[%s2 + $0x20] sm:$0xff]
  %v19 = vld [vmem:[%s2 + $0x28] sm:$0xff]
  %v20 = vld [vmem:[%s2 + $0x30] sm:$0xff]
  %v21 = vld [vmem:[%s2 + $0x38] sm:$0xff]
  %v22 = vld [vmem:[%s2 + $0x40] sm:$0xff]
  %v23 = vld [vmem:[%s2 + $0x48] sm:$0xff]
  %v24 = vld [vmem:[%s2 + $0x50] sm:$0xff]
  %v25 = vld [vmem:[%s2 + $0x58] sm:$0xff]
  %v26 = vld [vmem:[%s2 + $0x60] sm:$0xff]
  %v27 = vld [vmem:[%s2 + $0x68] sm:$0xff]
  %v28 = vld [vmem:[%s2 + $0x70] sm:$0xff]
  %v29 = vld [vmem:[%s2 + $0x78] sm:$0xff]
  %v30 = vld [vmem:[%s2 + $0x80] sm:$0xff]
  %v31 = vld [vmem:[%s2 + $0x88] sm:$0xff]
  %v32 = vld [vmem:[%s2 + $0x90] sm:$0xff]
  %v33 = vld [vmem:[%s2 + $0x98] sm:$0xff]
  %v34 = vld [vmem:[%s2 + $0xa0] sm:$0xff]
  %v35 = vld [vmem:[%s2 + $0xa8] sm:$0xff]
  %v36 = vld [vmem:[%s2 + $0xb0] sm:$0xff]
  %v37 = vld [vmem:[%s2 + $0xb8] sm:$0xff]
  %v38 = vld [vmem:[%s2 + $0xc0] sm:$0xff]
  %v39 = vld [vmem:[%s2 + $0xc8] sm:$0xff]
  %v40 = vld [vmem:[%s2 + $0xd0] sm:$0xff]
  %v41 = vld [vmem:[%s2 + $0xd8] sm:$0xff]
  %v42 = vld [vmem:[%s2 + $0xe0] sm:$0xff]
  %v43 = vld [vmem:[%s2 + $0xe8] sm:$0xff]
  %v44 = vld [vmem:[%s2 + $0xf0] sm:$0xff]
  %v45 = vld [vmem:[%s2 + $0xf8] sm:$0xff]
  %v46 = vld [vmem:[%s2 + $0x100] sm:$0xff]
  %v47 = vld [vmem:[%s2 + $0x108] sm:$0xff]
  %v48 = vld [vmem:[%s2 + $0x110] sm:$0xff]
  %v49 = vld [vmem:[%s2 + $0x118] sm:$0xff]
  %v50 = vld [vmem:[%s2 + $0x120] sm:$0xff]
  %v51 = vld [vmem:[%s2 + $0x128] sm:$0xff]
  %v52 = vld [vmem:[%s0] sm:$0x3f]
  %v53 = vld [vmem:[%s1] sm:$0x1]
  %v55 = vlaneseq
  %v56 = vshrl.u32 %v55, 7
  %v57 = vsub.s32 0, %v56
  %v58 = vrot.slane %v53, %v57
  %vm60 = vcmask 48128
  %v62 = vsel %vm60, %v14, 0
  %v65 = vsel %vm60, %v15, 0
  %v68 = vsel %vm60, %v16, 0
  %v71 = vsel %vm60, %v17, 0
  %v74 = vsel %vm60, %v18, 0
  %v77 = vsel %vm60, %v19, 0
  %v80 = vsel %vm60, %v20, 0
  %v83 = vsel %vm60, %v21, 0
  %v86 = vsel %vm60, %v22, 0
  %v89 = vsel %vm60, %v23, 0
  %v92 = vsel %vm60, %v24, 0
  %v95 = vsel %vm60, %v25, 0
  %v98 = vsel %vm60, %v26, 0
  %v101 = vsel %vm60, %v27, 0
  %v104 = vsel %vm60, %v28, 0
  %v107 = vsel %vm60, %v29, 0
  %v110 = vsel %vm60, %v30, 0
  %v113 = vsel %vm60, %v31, 0
  %v116 = vsel %vm60, %v32, 0
  %v119 = vsel %vm60, %v33, 0
  %v122 = vsel %vm60, %v34, 0
  %v125 = vsel %vm60, %v35, 0
  %v128 = vsel %vm60, %v36, 0
  %v131 = vsel %vm60, %v37, 0
  %v134 = vsel %vm60, %v38, 0
  %v137 = vsel %vm60, %v39, 0
  %v140 = vsel %vm60, %v40, 0
  %v143 = vsel %vm60, %v41, 0
  %v146 = vsel %vm60, %v42, 0
  %v149 = vsel %vm60, %v43, 0
  %v152 = vsel %vm60, %v44, 0
  %v155 = vsel %vm60, %v45, 0
  %v158 = vsel %vm60, %v46, 0
  %v161 = vsel %vm60, %v47, 0
  %v164 = vsel %vm60, %v48, 0
  %v167 = vsel %vm60, %v49, 0
  %v170 = vsel %vm60, %v50, 0
  %v173 = vsel %vm60, %v51, 0
  %vm175 = vcmask 1045504
  %v177 = vsel %vm175, %v52, 0
  %179 = vmatprep.subr.mxu0 0.0
  %180 = vmatpush1.msra.mxu0 0.0
  %181 = vmatprep.subr.mxu0 0.0
  %182 = vmatpush1.msra.mxu0 0.0
  %183 = vmatprep.subr.mxu0 0.0
  %184 = vmatpush1.msra.mxu0 0.0
  %185 = vmatprep.subr.mxu0 0.0
  %186 = vmatpush1.msra.mxu0 0.0
  %187 = vmatprep.subr.mxu0 0.0
  %188 = vmatpush1.msra.mxu0 0.0
  %189 = vmatprep.subr.mxu0 0.0
  %190 = vmatpush1.msra.mxu0 0.0
  %191 = vmatprep.subr.mxu0 0.0
  %192 = vmatpush1.msra.mxu0 0.0
  %193 = vmatprep.subr.mxu0 0.0
  %194 = vmatpush1.msra.mxu0 0.0
  %195 = vmatprep.subr.mxu0 0.0
  %196 = vmatpush1.msra.mxu0 0.0
  %197 = vmatprep.subr.mxu0 0.0
  %198 = vmatpush1.msra.mxu0 0.0
  %199 = vmatprep.subr.mxu0 0.0
  %200 = vmatpush1.msra.mxu0 0.0
  %201 = vmatprep.subr.mxu0 0.0
  %202 = vmatpush1.msra.mxu0 0.0
  %203 = vmatprep.subr.mxu0 0.0
  %204 = vmatpush1.msra.mxu0 0.0
  %205 = vmatprep.subr.mxu0 0.0
  %206 = vmatpush1.msra.mxu0 0.0
  %207 = vmatprep.subr.mxu0 0.0
  %208 = vmatpush1.msra.mxu0 0.0
  %209 = vmatprep.subr.mxu0 0.0
  %210 = vmatpush1.msra.mxu0 %v177
  %211 = vmatprep.subr.mxu0 0.0
  %212 = vmatpush2.msra.mxu0 0.0
  %213 = vmatprep.subr.mxu0 0.0
  %214 = vmatpush2.msra.mxu0 0.0
  %215 = vmatprep.subr.mxu0 0.0
  %216 = vmatpush2.msra.mxu0 0.0
  %217 = vmatprep.subr.mxu0 0.0
  %218 = vmatpush2.msra.mxu0 0.0
  %219 = vmatprep.subr.mxu0 0.0
  %220 = vmatpush2.msra.mxu0 0.0
  %221 = vmatprep.subr.mxu0 0.0
  %222 = vmatpush2.msra.mxu0 0.0
  %223 = vmatprep.subr.mxu0 0.0
  %224 = vmatpush2.msra.mxu0 0.0
  %225 = vmatprep.subr.mxu0 0.0
  %226 = vmatpush2.msra.mxu0 0.0
  %227 = vmatprep.subr.mxu0 0.0
  %228 = vmatpush2.msra.mxu0 0.0
  %229 = vmatprep.subr.mxu0 0.0
  %230 = vmatpush2.msra.mxu0 0.0
  %231 = vmatprep.subr.mxu0 0.0
  %232 = vmatpush2.msra.mxu0 0.0
  %233 = vmatprep.subr.mxu0 0.0
  %234 = vmatpush2.msra.mxu0 0.0
  %235 = vmatprep.subr.mxu0 0.0
  %236 = vmatpush2.msra.mxu0 0.0
  %237 = vmatprep.subr.mxu0 0.0
  %238 = vmatpush2.msra.mxu0 0.0
  %239 = vmatprep.subr.mxu0 0.0
  %240 = vmatpush2.msra.mxu0 0.0
  %241 = vmatprep.subr.mxu0 0.0
  %242 = vmatpush2.msra.mxu0 0.0
  %243 = vmatprep.mubr.f32.mxu0 0.0
  %244 = vmatmul.mubr.f32.gmra.mxu0 %v62
  %v245 = vpop.f32.mrf.mxu0
  %v246 = vadd.f32 %v58, %v245
  %v247 = vpop.f32.mrf.mxu0
  %248 = vmatprep.mubr.f32.mxu0 0.0
  %249 = vmatmul.mubr.f32.gmra.mxu0 %v65
  %v250 = vpop.f32.mrf.mxu0
  %v251 = vadd.f32 %v58, %v250
  %v252 = vpop.f32.mrf.mxu0
  %253 = vmatprep.mubr.f32.mxu0 0.0
  %254 = vmatmul.mubr.f32.gmra.mxu0 %v68
  %v255 = vpop.f32.mrf.mxu0
  %v256 = vadd.f32 %v58, %v255
  %v257 = vpop.f32.mrf.mxu0
  %258 = vmatprep.mubr.f32.mxu0 0.0
  %259 = vmatmul.mubr.f32.gmra.mxu0 %v71
  %v260 = vpop.f32.mrf.mxu0
  %v261 = vadd.f32 %v58, %v260
  %v262 = vpop.f32.mrf.mxu0
  %263 = vmatprep.mubr.f32.mxu0 0.0
  %264 = vmatmul.mubr.f32.gmra.mxu0 %v74
  %v265 = vpop.f32.mrf.mxu0
  %v266 = vadd.f32 %v58, %v265
  %v267 = vpop.f32.mrf.mxu0
  %268 = vmatprep.mubr.f32.mxu0 0.0
  %269 = vmatmul.mubr.f32.gmra.mxu0 %v77
  %v270 = vpop.f32.mrf.mxu0
  %v271 = vadd.f32 %v58, %v270
  %v272 = vpop.f32.mrf.mxu0
  %273 = vmatprep.mubr.f32.mxu0 0.0
  %274 = vmatmul.mubr.f32.gmra.mxu0 %v80
  %v275 = vpop.f32.mrf.mxu0
  %v276 = vadd.f32 %v58, %v275
  %v277 = vpop.f32.mrf.mxu0
  %278 = vmatprep.mubr.f32.mxu0 0.0
  %279 = vmatmul.mubr.f32.gmra.mxu0 %v83
  %v280 = vpop.f32.mrf.mxu0
  %v281 = vadd.f32 %v58, %v280
  %v282 = vpop.f32.mrf.mxu0
  %283 = vmatprep.mubr.f32.mxu0 0.0
  %284 = vmatmul.mubr.f32.gmra.mxu0 %v86
  %v285 = vpop.f32.mrf.mxu0
  %v286 = vadd.f32 %v58, %v285
  %v287 = vpop.f32.mrf.mxu0
  %288 = vmatprep.mubr.f32.mxu0 0.0
  %289 = vmatmul.mubr.f32.gmra.mxu0 %v89
  %v290 = vpop.f32.mrf.mxu0
  %v291 = vadd.f32 %v58, %v290
  %v292 = vpop.f32.mrf.mxu0
  %293 = vmatprep.mubr.f32.mxu0 0.0
  %294 = vmatmul.mubr.f32.gmra.mxu0 %v92
  %v295 = vpop.f32.mrf.mxu0
  %v296 = vadd.f32 %v58, %v295
  %v297 = vpop.f32.mrf.mxu0
  %298 = vmatprep.mubr.f32.mxu0 0.0
  %299 = vmatmul.mubr.f32.gmra.mxu0 %v95
  %v300 = vpop.f32.mrf.mxu0
  %v301 = vadd.f32 %v58, %v300
  %v302 = vpop.f32.mrf.mxu0
  %303 = vmatprep.mubr.f32.mxu0 0.0
  %304 = vmatmul.mubr.f32.gmra.mxu0 %v98
  %v305 = vpop.f32.mrf.mxu0
  %v306 = vadd.f32 %v58, %v305
  %v307 = vpop.f32.mrf.mxu0
  %308 = vmatprep.mubr.f32.mxu0 0.0
  %309 = vmatmul.mubr.f32.gmra.mxu0 %v101
  %v310 = vpop.f32.mrf.mxu0
  %v311 = vadd.f32 %v58, %v310
  %v312 = vpop.f32.mrf.mxu0
  %313 = vmatprep.mubr.f32.mxu0 0.0
  %314 = vmatmul.mubr.f32.gmra.mxu0 %v104
  %v315 = vpop.f32.mrf.mxu0
  %v316 = vadd.f32 %v58, %v315
  %v317 = vpop.f32.mrf.mxu0
  %318 = vmatprep.mubr.f32.mxu0 0.0
  %319 = vmatmul.mubr.f32.gmra.mxu0 %v107
  %v320 = vpop.f32.mrf.mxu0
  %v321 = vadd.f32 %v58, %v320
  %v322 = vpop.f32.mrf.mxu0
  %323 = vmatprep.mubr.f32.mxu0 0.0
  %324 = vmatmul.mubr.f32.gmra.mxu0 %v110
  %v325 = vpop.f32.mrf.mxu0
  %v326 = vadd.f32 %v58, %v325
  %v327 = vpop.f32.mrf.mxu0
  %328 = vmatprep.mubr.f32.mxu0 0.0
  %329 = vmatmul.mubr.f32.gmra.mxu0 %v113
  %v330 = vpop.f32.mrf.mxu0
  %v331 = vadd.f32 %v58, %v330
  %v332 = vpop.f32.mrf.mxu0
  %333 = vmatprep.mubr.f32.mxu0 0.0
  %334 = vmatmul.mubr.f32.gmra.mxu0 %v116
  %v335 = vpop.f32.mrf.mxu0
  %v336 = vadd.f32 %v58, %v335
  %v337 = vpop.f32.mrf.mxu0
  %338 = vmatprep.mubr.f32.mxu0 0.0
  %339 = vmatmul.mubr.f32.gmra.mxu0 %v119
  %v340 = vpop.f32.mrf.mxu0
  %v341 = vadd.f32 %v58, %v340
  %v342 = vpop.f32.mrf.mxu0
  %343 = vmatprep.mubr.f32.mxu0 0.0
  %344 = vmatmul.mubr.f32.gmra.mxu0 %v122
  %v345 = vpop.f32.mrf.mxu0
  %v346 = vadd.f32 %v58, %v345
  %v347 = vpop.f32.mrf.mxu0
  %348 = vmatprep.mubr.f32.mxu0 0.0
  %349 = vmatmul.mubr.f32.gmra.mxu0 %v125
  %v350 = vpop.f32.mrf.mxu0
  %v351 = vadd.f32 %v58, %v350
  %v352 = vpop.f32.mrf.mxu0
  %353 = vmatprep.mubr.f32.mxu0 0.0
  %354 = vmatmul.mubr.f32.gmra.mxu0 %v128
  %v355 = vpop.f32.mrf.mxu0
  %v356 = vadd.f32 %v58, %v355
  %v357 = vpop.f32.mrf.mxu0
  %358 = vmatprep.mubr.f32.mxu0 0.0
  %359 = vmatmul.mubr.f32.gmra.mxu0 %v131
  %v360 = vpop.f32.mrf.mxu0
  %v361 = vadd.f32 %v58, %v360
  %v362 = vpop.f32.mrf.mxu0
  %363 = vmatprep.mubr.f32.mxu0 0.0
  %364 = vmatmul.mubr.f32.gmra.mxu0 %v134
  %v365 = vpop.f32.mrf.mxu0
  %v366 = vadd.f32 %v58, %v365
  %v367 = vpop.f32.mrf.mxu0
  %368 = vmatprep.mubr.f32.mxu0 0.0
  %369 = vmatmul.mubr.f32.gmra.mxu0 %v137
  %v370 = vpop.f32.mrf.mxu0
  %v371 = vadd.f32 %v58, %v370
  %v372 = vpop.f32.mrf.mxu0
  %373 = vmatprep.mubr.f32.mxu0 0.0
  %374 = vmatmul.mubr.f32.gmra.mxu0 %v140
  %v375 = vpop.f32.mrf.mxu0
  %v376 = vadd.f32 %v58, %v375
  %v377 = vpop.f32.mrf.mxu0
  %378 = vmatprep.mubr.f32.mxu0 0.0
  %379 = vmatmul.mubr.f32.gmra.mxu0 %v143
  %v380 = vpop.f32.mrf.mxu0
  %v381 = vadd.f32 %v58, %v380
  %v382 = vpop.f32.mrf.mxu0
  %383 = vmatprep.mubr.f32.mxu0 0.0
  %384 = vmatmul.mubr.f32.gmra.mxu0 %v146
  %v385 = vpop.f32.mrf.mxu0
  %v386 = vadd.f32 %v58, %v385
  %v387 = vpop.f32.mrf.mxu0
  %388 = vmatprep.mubr.f32.mxu0 0.0
  %389 = vmatmul.mubr.f32.gmra.mxu0 %v149
  %v390 = vpop.f32.mrf.mxu0
  %v391 = vadd.f32 %v58, %v390
  %v392 = vpop.f32.mrf.mxu0
  %393 = vmatprep.mubr.f32.mxu0 0.0
  %394 = vmatmul.mubr.f32.gmra.mxu0 %v152
  %v395 = vpop.f32.mrf.mxu0
  %v396 = vadd.f32 %v58, %v395
  %v397 = vpop.f32.mrf.mxu0
  %398 = vmatprep.mubr.f32.mxu0 0.0
  %399 = vmatmul.mubr.f32.gmra.mxu0 %v155
  %v400 = vpop.f32.mrf.mxu0
  %v401 = vadd.f32 %v58, %v400
  %v402 = vpop.f32.mrf.mxu0
  %403 = vmatprep.mubr.f32.mxu0 0.0
  %404 = vmatmul.mubr.f32.gmra.mxu0 %v158
  %v405 = vpop.f32.mrf.mxu0
  %v406 = vadd.f32 %v58, %v405
  %v407 = vpop.f32.mrf.mxu0
  %408 = vmatprep.mubr.f32.mxu0 0.0
  %409 = vmatmul.mubr.f32.gmra.mxu0 %v161
  %v410 = vpop.f32.mrf.mxu0
  %v411 = vadd.f32 %v58, %v410
  %v412 = vpop.f32.mrf.mxu0
  %413 = vmatprep.mubr.f32.mxu0 0.0
  %414 = vmatmul.mubr.f32.gmra.mxu0 %v164
  %v415 = vpop.f32.mrf.mxu0
  %v416 = vadd.f32 %v58, %v415
  %v417 = vpop.f32.mrf.mxu0
  %418 = vmatprep.mubr.f32.mxu0 0.0
  %419 = vmatmul.mubr.f32.gmra.mxu0 %v167
  %v420 = vpop.f32.mrf.mxu0
  %v421 = vadd.f32 %v58, %v420
  %v422 = vpop.f32.mrf.mxu0
  %423 = vmatprep.mubr.f32.mxu0 0.0
  %424 = vmatmul.mubr.f32.gmra.mxu0 %v170
  %v425 = vpop.f32.mrf.mxu0
  %v426 = vadd.f32 %v58, %v425
  %v427 = vpop.f32.mrf.mxu0
  %428 = vmatprep.mubr.f32.mxu0 0.0
  %429 = vmatmul.mubr.f32.gmra.mxu0 %v173
  %v430 = vpop.f32.mrf.mxu0
  %v431 = vadd.f32 %v58, %v430
  %v432 = vpop.f32.mrf.mxu0
  %433 = vdwg.mxu0
  %vm434 = vcmask 261120
  %435 = vst.msk [vmem:[%s3] sm:$0xff] %vm434, %v246
  %436 = vst.msk [vmem:[%s3 + $0x8] sm:$0xff] %vm434, %v251
  %437 = vst.msk [vmem:[%s3 + $0x10] sm:$0xff] %vm434, %v256
  %438 = vst.msk [vmem:[%s3 + $0x18] sm:$0xff] %vm434, %v261
  %439 = vst.msk [vmem:[%s3 + $0x20] sm:$0xff] %vm434, %v266
  %440 = vst.msk [vmem:[%s3 + $0x28] sm:$0xff] %vm434, %v271
  %441 = vst.msk [vmem:[%s3 + $0x30] sm:$0xff] %vm434, %v276
  %442 = vst.msk [vmem:[%s3 + $0x38] sm:$0xff] %vm434, %v281
  %443 = vst.msk [vmem:[%s3 + $0x40] sm:$0xff] %vm434, %v286
  %444 = vst.msk [vmem:[%s3 + $0x48] sm:$0xff] %vm434, %v291
  %445 = vst.msk [vmem:[%s3 + $0x50] sm:$0xff] %vm434, %v296
  %446 = vst.msk [vmem:[%s3 + $0x58] sm:$0xff] %vm434, %v301
  %447 = vst.msk [vmem:[%s3 + $0x60] sm:$0xff] %vm434, %v306
  %448 = vst.msk [vmem:[%s3 + $0x68] sm:$0xff] %vm434, %v311
  %449 = vst.msk [vmem:[%s3 + $0x70] sm:$0xff] %vm434, %v316
  %450 = vst.msk [vmem:[%s3 + $0x78] sm:$0xff] %vm434, %v321
  %451 = vst.msk [vmem:[%s3 + $0x80] sm:$0xff] %vm434, %v326
  %452 = vst.msk [vmem:[%s3 + $0x88] sm:$0xff] %vm434, %v331
  %453 = vst.msk [vmem:[%s3 + $0x90] sm:$0xff] %vm434, %v336
  %454 = vst.msk [vmem:[%s3 + $0x98] sm:$0xff] %vm434, %v341
  %455 = vst.msk [vmem:[%s3 + $0xa0] sm:$0xff] %vm434, %v346
  %456 = vst.msk [vmem:[%s3 + $0xa8] sm:$0xff] %vm434, %v351
  %457 = vst.msk [vmem:[%s3 + $0xb0] sm:$0xff] %vm434, %v356
  %458 = vst.msk [vmem:[%s3 + $0xb8] sm:$0xff] %vm434, %v361
  %459 = vst.msk [vmem:[%s3 + $0xc0] sm:$0xff] %vm434, %v366
  %460 = vst.msk [vmem:[%s3 + $0xc8] sm:$0xff] %vm434, %v371
  %461 = vst.msk [vmem:[%s3 + $0xd0] sm:$0xff] %vm434, %v376
  %462 = vst.msk [vmem:[%s3 + $0xd8] sm:$0xff] %vm434, %v381
  %463 = vst.msk [vmem:[%s3 + $0xe0] sm:$0xff] %vm434, %v386
  %464 = vst.msk [vmem:[%s3 + $0xe8] sm:$0xff] %vm434, %v391
  %465 = vst.msk [vmem:[%s3 + $0xf0] sm:$0xff] %vm434, %v396
  %466 = vst.msk [vmem:[%s3 + $0xf8] sm:$0xff] %vm434, %v401
  %467 = vst.msk [vmem:[%s3 + $0x100] sm:$0xff] %vm434, %v406
  %468 = vst.msk [vmem:[%s3 + $0x108] sm:$0xff] %vm434, %v411
  %469 = vst.msk [vmem:[%s3 + $0x110] sm:$0xff] %vm434, %v416
  %470 = vst.msk [vmem:[%s3 + $0x118] sm:$0xff] %vm434, %v421
  %471 = vst.msk [vmem:[%s3 + $0x120] sm:$0xff] %vm434, %v426
  %472 = vst.msk [vmem:[%s3 + $0x128] sm:$0xff] %vm434, %v431
  // Predicated region
  $region14: #{_rotation_invariant_impl.1} parent=0 // pred_check
    _
  $region15: #{_rotation_invariant_impl.1} parent=0 // pred_check_branch
    %474 = sbr.rel (0) target = $region17
  $region16: #{_rotation_invariant_impl.1} parent=0 // pred_region
    _
  $region17: #{_rotation_invariant_impl.1} parent=0 // pred_fallthru
    _
  // Predicated region
  $region18: #{_rotation_invariant_impl.1} parent=0 // pred_check
    _
  $region19: #{_rotation_invariant_impl.1} parent=0 // pred_check_branch
    %476 = sbr.rel (0) target = $region21
  $region20: #{_rotation_invariant_impl.1} parent=0 // pred_region
    _
  $region21: #{_rotation_invariant_impl.1} parent=0 // pred_fallthru
    _

</llo_original>
